<compile_context>
chip_gen: v7x
topology: tpu7x:2x2x1
jax: 0.10.0
libtpu: 0.0.40
codegen_flags: <defaults>
</compile_context>

<pallas_src>
import jax
import jax.numpy as jnp
from jax.experimental import pallas as pl
from jax.experimental.pallas import tpu as pltpu

EMBED_D = 768


def _patch_embed_kernel(x_ref, w_ref, b_ref, o_ref):
    # x_ref: (nb, C, tp, D*D)  input dtype (native layout block of x)
    # w_ref: (C, D*D, EMBED_D) bf16, fully resident
    # b_ref: (1, EMBED_D)      f32, resident
    # o_ref: (nb, tp, EMBED_D) out dtype (lane-dense 768-wide)
    nb = x_ref.shape[0]
    n_ch = x_ref.shape[1]
    bias = b_ref[...]  # (1, EMBED_D) f32, hoisted once

    for b in range(nb):  # static unroll over images in this block
        # Per-channel partial matmuls replace the transpose(1,2)+flatten(2):
        #   out[b] = sum_c x[b, c] @ W[c]  (NN contraction, f32 accumulation)
        acc = jnp.dot(x_ref[b, 0].astype(jnp.bfloat16), w_ref[0],
                      preferred_element_type=jnp.float32)
        for c in range(1, n_ch):
            acc += jnp.dot(x_ref[b, c].astype(jnp.bfloat16), w_ref[c],
                           preferred_element_type=jnp.float32)
        o_ref[b] = (acc + bias).astype(o_ref.dtype)


def patch_embed(x, weight, bias, *, rows_per_step=1024, out_dtype=None):
    """x: (N, C, P, D, D); weight: (EMBED_D, C*D*D); bias: (EMBED_D,).

    out_dtype defaults to x.dtype; pass jnp.bfloat16 if the consumer tolerates
    it (cuts the largest HBM stream by 2x).
    """
    N, C, P, D, D2 = x.shape
    assert D == D2
    DD = D * D
    K = C * DD
    assert weight.shape == (EMBED_D, K)
    assert bias.shape == (EMBED_D,)
    out_dtype = jnp.dtype(x.dtype) if out_dtype is None else jnp.dtype(out_dtype)

    # Free, layout-preserving reshape only (merges the trailing D,D dims).
    # No transpose, no pad, no extra HBM copy of the activation slab.
    x4 = x.reshape(N, C, P, DD)

    # One-time weight prep (~1 MiB): (768, K) -> (K, 768) -> (C, DD, 768) bf16.
    w3 = jnp.transpose(weight, (1, 0)).reshape(C, DD, EMBED_D).astype(jnp.bfloat16)
    b2 = bias.reshape(1, EMBED_D).astype(jnp.float32)

    # Row tiling: tp patches per image, nb images per grid step
    # (target ~rows_per_step rows/step to amortize per-step overhead).
    if P > rows_per_step:
        nb = 1
        if rows_per_step >= 256:
            tp = (rows_per_step // 256) * 256   # MXU-friendly row multiple
        else:
            tp = max(16, (rows_per_step // 16) * 16)
    else:
        tp = P                                   # full-dim block: always legal
        nb = max(1, min(N, rows_per_step // max(P, 1), 8))  # cap unroll depth

    grid = (pl.cdiv(N, nb), pl.cdiv(P, tp))      # partial tail blocks are clipped

    # VMEM budget from the actual tiles (double-buffered), capped for v7x.
    x_bytes = nb * C * tp * DD * x.dtype.itemsize
    o_bytes = nb * tp * EMBED_D * out_dtype.itemsize
    w_bytes = C * DD * EMBED_D * 2
    need = 2 * (x_bytes + o_bytes) + 2 * w_bytes + EMBED_D * 4
    vmem_limit = int(min(max(need * 3 // 2, 16 << 20), 48 << 20))

    cost = pl.CostEstimate(
        flops=2 * N * P * K * EMBED_D,
        transcendentals=0,
        bytes_accessed=(N * C * P * DD * x.dtype.itemsize   # activations (read once)
                        + C * DD * EMBED_D * 2              # resident weight
                        + EMBED_D * 4                       # bias
                        + N * P * EMBED_D * out_dtype.itemsize),  # output
    )

    out = pl.pallas_call(
        _patch_embed_kernel,
        out_shape=jax.ShapeDtypeStruct((N, P, EMBED_D), out_dtype),
        grid_spec=pltpu.PrefetchScalarGridSpec(
            num_scalar_prefetch=0,
            grid=grid,
            in_specs=[
                # Block of the ORIGINAL layout: nb images x all C channels x tp rows.
                pl.BlockSpec((nb, C, tp, DD), lambda ni, pi: (ni, 0, pi, 0)),
                # Full weight, VMEM-resident (constant index_map -> DMA'd once).
                pl.BlockSpec((C, DD, EMBED_D), lambda ni, pi: (0, 0, 0)),
                # Bias, resident.
                pl.BlockSpec((1, EMBED_D), lambda ni, pi: (0, 0)),
            ],
            out_specs=pl.BlockSpec((nb, tp, EMBED_D), lambda ni, pi: (ni, pi, 0)),
        ),
        compiler_params=pltpu.CompilerParams(
            dimension_semantics=("parallel", "parallel"),   # megacore sharding
            vmem_limit_bytes=vmem_limit,
        ),
        cost_estimate=cost,
    )(x4, w3, b2)

    return out


if __name__ == "__main__":
    # Small, module-consistent shapes: N=2 batches, C=3 channels,
    # P=8 patches, patch_dim D=4  ->  in_features = 3*4*4 = 48.
    N, C, P, D = 2, 3, 8, 4
    in_features = C * D * D

    key = jax.random.PRNGKey(0)
    kx, kw, kb = jax.random.split(key, 3)

    x = jax.random.normal(kx, (N, C, P, D, D), dtype=jnp.float32)

    # Deterministic nn.Linear-style init: U(-1/sqrt(fan_in), 1/sqrt(fan_in)).
    bound = 1.0 / (in_features ** 0.5)
    weight = jax.random.uniform(
        kw, (EMBED_D, in_features), minval=-bound, maxval=bound, dtype=jnp.float32
    )
    bias = jax.random.uniform(
        kb, (EMBED_D,), minval=-bound, maxval=bound, dtype=jnp.float32
    )

    out = patch_embed(x, weight, bias)
    out = jax.block_until_ready(out)

    # Reference in plain JAX (same math as the PyTorch forward), f32.
    ref = (
        jnp.transpose(x, (0, 2, 1, 3, 4)).reshape(N, P, in_features) @ weight.T
        + bias
    )
    assert out.shape == (N, P, EMBED_D)
    # bf16 matmul inputs with f32 accumulation -> loosened tolerance.
    assert jnp.allclose(out, ref, atol=2e-2, rtol=2e-2)

    print("KERNEL_OK")
</pallas_src>

<mosaic_0001>
module attributes {stable_mosaic.version = 11 : i64} {
  func.func @_patch_embed_kernel(%arg0: i32, %arg1: i32, %arg2: memref<2x3x8x16xf32, #tpu.memory_space<vmem>>, %arg3: memref<3x16x768xbf16, #tpu.memory_space<vmem>>, %arg4: memref<1x768xf32, #tpu.memory_space<vmem>>, %arg5: memref<2x8x768xf32, #tpu.memory_space<vmem>>) attributes {dimension_semantics = [#tpu.dimension_semantics<parallel>, #tpu.dimension_semantics<parallel>], iteration_bounds = array<i64: 1, 1>, scalar_prefetch = 0 : i64, scratch_operands = 0 : i64, tpu.core_type = #tpu.core_type<tc>, window_params = [{transform_indices = @transform_0, window_bounds = array<i64: 2, 3, 8, 16>}, {pipeline_mode = #tpu.pipeline_mode<synchronous>, transform_indices = @transform_1, window_bounds = array<i64: 3, 16, 768>}, {pipeline_mode = #tpu.pipeline_mode<synchronous>, transform_indices = @transform_2, window_bounds = array<i64: 1, 768>}, {transform_indices = @transform_3, window_bounds = array<i64: 2, 8, 768>}]} {
    %c0 = arith.constant 0 : index
    %c0_0 = arith.constant 0 : index
    %0 = vector.load %arg4[%c0, %c0_0] : memref<1x768xf32, #tpu.memory_space<vmem>>, vector<1x768xf32>
    %c0_1 = arith.constant 0 : index
    %c0_2 = arith.constant 0 : index
    %c0_3 = arith.constant 0 : index
    %c0_4 = arith.constant 0 : index
    %1 = vector.load %arg2[%c0_1, %c0_2, %c0_3, %c0_4] : memref<2x3x8x16xf32, #tpu.memory_space<vmem>>, vector<1x1x8x16xf32>
    %2 = vector.shape_cast %1 : vector<1x1x8x16xf32> to vector<8x16xf32>
    %3 = arith.truncf %2 : vector<8x16xf32> to vector<8x16xbf16>
    %c0_5 = arith.constant 0 : index
    %c0_6 = arith.constant 0 : index
    %c0_7 = arith.constant 0 : index
    %4 = vector.load %arg3[%c0_5, %c0_6, %c0_7] : memref<3x16x768xbf16, #tpu.memory_space<vmem>>, vector<1x16x768xbf16>
    %5 = vector.shape_cast %4 : vector<1x16x768xbf16> to vector<16x768xbf16>
    %cst = arith.constant dense<0.000000e+00> : vector<8x768xf32>
    %6 = tpu.matmul %3, %5, %cst {dimension_numbers = #tpu.dot_dimension_numbers<[1], [0], [0], [1], [0, 0, 1, 1], [], []>} : vector<8x16xbf16>, vector<16x768xbf16>, vector<8x768xf32> -> vector<8x768xf32>
    %c0_8 = arith.constant 0 : index
    %c1 = arith.constant 1 : index
    %c0_9 = arith.constant 0 : index
    %c0_10 = arith.constant 0 : index
    %7 = vector.load %arg2[%c0_8, %c1, %c0_9, %c0_10] : memref<2x3x8x16xf32, #tpu.memory_space<vmem>>, vector<1x1x8x16xf32>
    %8 = vector.shape_cast %7 : vector<1x1x8x16xf32> to vector<8x16xf32>
    %9 = arith.truncf %8 : vector<8x16xf32> to vector<8x16xbf16>
    %c1_11 = arith.constant 1 : index
    %c0_12 = arith.constant 0 : index
    %c0_13 = arith.constant 0 : index
    %10 = vector.load %arg3[%c1_11, %c0_12, %c0_13] : memref<3x16x768xbf16, #tpu.memory_space<vmem>>, vector<1x16x768xbf16>
    %11 = vector.shape_cast %10 : vector<1x16x768xbf16> to vector<16x768xbf16>
    %cst_14 = arith.constant dense<0.000000e+00> : vector<8x768xf32>
    %12 = tpu.matmul %9, %11, %cst_14 {dimension_numbers = #tpu.dot_dimension_numbers<[1], [0], [0], [1], [0, 0, 1, 1], [], []>} : vector<8x16xbf16>, vector<16x768xbf16>, vector<8x768xf32> -> vector<8x768xf32>
    %13 = arith.addf %6, %12 : vector<8x768xf32>
    %c0_15 = arith.constant 0 : index
    %c2 = arith.constant 2 : index
    %c0_16 = arith.constant 0 : index
    %c0_17 = arith.constant 0 : index
    %14 = vector.load %arg2[%c0_15, %c2, %c0_16, %c0_17] : memref<2x3x8x16xf32, #tpu.memory_space<vmem>>, vector<1x1x8x16xf32>
    %15 = vector.shape_cast %14 : vector<1x1x8x16xf32> to vector<8x16xf32>
    %16 = arith.truncf %15 : vector<8x16xf32> to vector<8x16xbf16>
    %c2_18 = arith.constant 2 : index
    %c0_19 = arith.constant 0 : index
    %c0_20 = arith.constant 0 : index
    %17 = vector.load %arg3[%c2_18, %c0_19, %c0_20] : memref<3x16x768xbf16, #tpu.memory_space<vmem>>, vector<1x16x768xbf16>
    %18 = vector.shape_cast %17 : vector<1x16x768xbf16> to vector<16x768xbf16>
    %cst_21 = arith.constant dense<0.000000e+00> : vector<8x768xf32>
    %19 = tpu.matmul %16, %18, %cst_21 {dimension_numbers = #tpu.dot_dimension_numbers<[1], [0], [0], [1], [0, 0, 1, 1], [], []>} : vector<8x16xbf16>, vector<16x768xbf16>, vector<8x768xf32> -> vector<8x768xf32>
    %20 = arith.addf %13, %19 : vector<8x768xf32>
    %21 = vector.broadcast %0 : vector<1x768xf32> to vector<8x768xf32>
    %22 = arith.addf %20, %21 : vector<8x768xf32>
    %c0_22 = arith.constant 0 : index
    %c0_23 = arith.constant 0 : index
    %c0_24 = arith.constant 0 : index
    %23 = vector.load %arg5[%c0_22, %c0_23, %c0_24] : memref<2x8x768xf32, #tpu.memory_space<vmem>>, vector<1x8x768xf32>
    %24 = vector.shape_cast %23 : vector<1x8x768xf32> to vector<8x768xf32>
    %25 = vector.shape_cast %22 : vector<8x768xf32> to vector<1x8x768xf32>
    tpu.vector_store %arg5[%c0_22, %c0_23, %c0_24], %25 {strides = array<i32>} : memref<2x8x768xf32, #tpu.memory_space<vmem>>, vector<1x8x768xf32>,
    %c1_25 = arith.constant 1 : index
    %c0_26 = arith.constant 0 : index
    %c0_27 = arith.constant 0 : index
    %c0_28 = arith.constant 0 : index
    %26 = vector.load %arg2[%c1_25, %c0_26, %c0_27, %c0_28] : memref<2x3x8x16xf32, #tpu.memory_space<vmem>>, vector<1x1x8x16xf32>
    %27 = vector.shape_cast %26 : vector<1x1x8x16xf32> to vector<8x16xf32>
    %28 = arith.truncf %27 : vector<8x16xf32> to vector<8x16xbf16>
    %c0_29 = arith.constant 0 : index
    %c0_30 = arith.constant 0 : index
    %c0_31 = arith.constant 0 : index
    %29 = vector.load %arg3[%c0_29, %c0_30, %c0_31] : memref<3x16x768xbf16, #tpu.memory_space<vmem>>, vector<1x16x768xbf16>
    %30 = vector.shape_cast %29 : vector<1x16x768xbf16> to vector<16x768xbf16>
    %cst_32 = arith.constant dense<0.000000e+00> : vector<8x768xf32>
    %31 = tpu.matmul %28, %30, %cst_32 {dimension_numbers = #tpu.dot_dimension_numbers<[1], [0], [0], [1], [0, 0, 1, 1], [], []>} : vector<8x16xbf16>, vector<16x768xbf16>, vector<8x768xf32> -> vector<8x768xf32>
    %c1_33 = arith.constant 1 : index
    %c1_34 = arith.constant 1 : index
    %c0_35 = arith.constant 0 : index
    %c0_36 = arith.constant 0 : index
    %32 = vector.load %arg2[%c1_33, %c1_34, %c0_35, %c0_36] : memref<2x3x8x16xf32, #tpu.memory_space<vmem>>, vector<1x1x8x16xf32>
    %33 = vector.shape_cast %32 : vector<1x1x8x16xf32> to vector<8x16xf32>
    %34 = arith.truncf %33 : vector<8x16xf32> to vector<8x16xbf16>
    %c1_37 = arith.constant 1 : index
    %c0_38 = arith.constant 0 : index
    %c0_39 = arith.constant 0 : index
    %35 = vector.load %arg3[%c1_37, %c0_38, %c0_39] : memref<3x16x768xbf16, #tpu.memory_space<vmem>>, vector<1x16x768xbf16>
    %36 = vector.shape_cast %35 : vector<1x16x768xbf16> to vector<16x768xbf16>
    %cst_40 = arith.constant dense<0.000000e+00> : vector<8x768xf32>
    %37 = tpu.matmul %34, %36, %cst_40 {dimension_numbers = #tpu.dot_dimension_numbers<[1], [0], [0], [1], [0, 0, 1, 1], [], []>} : vector<8x16xbf16>, vector<16x768xbf16>, vector<8x768xf32> -> vector<8x768xf32>
    %38 = arith.addf %31, %37 : vector<8x768xf32>
    %c1_41 = arith.constant 1 : index
    %c2_42 = arith.constant 2 : index
    %c0_43 = arith.constant 0 : index
    %c0_44 = arith.constant 0 : index
    %39 = vector.load %arg2[%c1_41, %c2_42, %c0_43, %c0_44] : memref<2x3x8x16xf32, #tpu.memory_space<vmem>>, vector<1x1x8x16xf32>
    %40 = vector.shape_cast %39 : vector<1x1x8x16xf32> to vector<8x16xf32>
    %41 = arith.truncf %40 : vector<8x16xf32> to vector<8x16xbf16>
    %c2_45 = arith.constant 2 : index
    %c0_46 = arith.constant 0 : index
    %c0_47 = arith.constant 0 : index
    %42 = vector.load %arg3[%c2_45, %c0_46, %c0_47] : memref<3x16x768xbf16, #tpu.memory_space<vmem>>, vector<1x16x768xbf16>
    %43 = vector.shape_cast %42 : vector<1x16x768xbf16> to vector<16x768xbf16>
    %cst_48 = arith.constant dense<0.000000e+00> : vector<8x768xf32>
    %44 = tpu.matmul %41, %43, %cst_48 {dimension_numbers = #tpu.dot_dimension_numbers<[1], [0], [0], [1], [0, 0, 1, 1], [], []>} : vector<8x16xbf16>, vector<16x768xbf16>, vector<8x768xf32> -> vector<8x768xf32>
    %45 = arith.addf %38, %44 : vector<8x768xf32>
    %46 = vector.broadcast %0 : vector<1x768xf32> to vector<8x768xf32>
    %47 = arith.addf %45, %46 : vector<8x768xf32>
    %c1_49 = arith.constant 1 : index
    %c0_50 = arith.constant 0 : index
    %c0_51 = arith.constant 0 : index
    %48 = vector.load %arg5[%c1_49, %c0_50, %c0_51] : memref<2x8x768xf32, #tpu.memory_space<vmem>>, vector<1x8x768xf32>
    %49 = vector.shape_cast %48 : vector<1x8x768xf32> to vector<8x768xf32>
    %50 = vector.shape_cast %47 : vector<8x768xf32> to vector<1x8x768xf32>
    tpu.vector_store %arg5[%c1_49, %c0_50, %c0_51], %50 {strides = array<i32>} : memref<2x8x768xf32, #tpu.memory_space<vmem>>, vector<1x8x768xf32>,
    return
  }
  func.func @transform_0(%arg0: i32, %arg1: i32) -> (i32, i32, i32, i32) {
    %c0_i32 = arith.constant 0 : i32
    %c0_i32_0 = arith.constant 0 : i32
    %c0_i32_1 = arith.constant 0 : i32
    return %arg0, %c0_i32, %arg1, %c0_i32_0 : i32, i32, i32, i32
  }
  func.func @transform_1(%arg0: i32, %arg1: i32) -> (i32, i32, i32) {
    %c0_i32 = arith.constant 0 : i32
    %c0_i32_0 = arith.constant 0 : i32
    %c0_i32_1 = arith.constant 0 : i32
    %c0_i32_2 = arith.constant 0 : i32
    return %c0_i32, %c0_i32_0, %c0_i32_1 : i32, i32, i32
  }
  func.func @transform_2(%arg0: i32, %arg1: i32) -> (i32, i32) {
    %c0_i32 = arith.constant 0 : i32
    %c0_i32_0 = arith.constant 0 : i32
    %c0_i32_1 = arith.constant 0 : i32
    return %c0_i32, %c0_i32_0 : i32, i32
  }
  func.func @transform_3(%arg0: i32, %arg1: i32) -> (i32, i32, i32) {
    %c0_i32 = arith.constant 0 : i32
    %c0_i32_0 = arith.constant 0 : i32
    return %arg0, %arg1, %c0_i32 : i32, i32, i32
  }
}

</mosaic_0001>

<llo_original>
// kernel: tpu_custom_call.1
$region0: #{tpu_custom_call.1}
  #allocation0 [shape = 'u32[]', space=smem, size = 0x4, offset = 0x4, fixed_abs, tag = 'smem constant byte address 0x4 - core index']
  #allocation1 [shape = 'u32[144,128]{1,0:T(1,128)}', space=vmem, size = 0x12000, scoped, tag = 'internal scratch']
  %s0 = inlined_call_operand.hbm [shape: f32[2,3,8,16], index: 0, kind: input, shape index: {}]
  %s1 = inlined_call_operand.hbm [shape: bf16[3,16,768], index: 1, kind: input, shape index: {}]
  %s2 = inlined_call_operand.vmem [shape: f32[1,768], index: 2, kind: input, shape index: {}]
  %s3 = inlined_call_operand.hbm [shape: f32[2,8,768], index: 3, kind: output, shape index: {}]
  %s4 = sld [smem:[#allocation0]]
  $region30: #{tpu_custom_call.1} parent=0
    _
  %s6 = ssub.s32 1, %s4
  %s7 = scalar_select 0, %s6, %s4
  $region1: #{tpu_custom_call.1} parent=0
    #allocation2 [shape = 'u8[24576]{0}', space=vmem, size = 0x6000, scoped, tag = 'input window, operand 0, single buffered']
    #allocation3 [shape = 's32[1]{0}', space=sflag, size = 0x4, scoped, tag = 'scoped memory for tpu_custom_call.1']
    #allocation4 [shape = 's32[1]{0}', space=sflag, size = 0x4, scoped, tag = 'scoped memory for tpu_custom_call.1']
    #allocation5 [shape = 'u8[73728]{0}', space=vmem, size = 0x12000, scoped, tag = 'input window, operand 1, single buffered']
    #allocation6 [shape = 's32[1]{0}', space=sflag, size = 0x4, scoped, tag = 'scoped memory for tpu_custom_call.1']
    #allocation7 [shape = 'u8[49152]{0}', space=vmem, size = 0xc000, scoped, tag = 'output window, operand 0, single buffered']
    %8 = vsyncpa [#allocation3], 0
    %9 = vsyncpa [#allocation6], 0
    %10 = vsyncpa [#allocation4], 0
    // Predicated region
    $region2: #{tpu_custom_call.1} parent=1 // pred_check
      _
    $region3: #{tpu_custom_call.1} parent=1 // pred_check_branch
      %12 = sbr.rel (0) target = $region5
    $region4: #{tpu_custom_call.1} parent=1 // pred_region
      %s14 = ssub.s32 768, 768
      %15 = vsyncadd [#allocation3], %s14
      %s16 = sshll.u32 [#allocation2], 4
      %s17 = int_to_ptr.vmem [resolvable:$true] %s16
      %22 = dma.hbm_to_vmem [thread:$0]  %s0, 768, %s17, [#allocation3], 128, 128, 8
    $region5: #{tpu_custom_call.1} parent=1 // pred_fallthru
      _
    // Predicated region
    $region6: #{tpu_custom_call.1} parent=1 // pred_check
      _
    $region7: #{tpu_custom_call.1} parent=1 // pred_check_branch
      %24 = sbr.rel (0) target = $region9
    $region8: #{tpu_custom_call.1} parent=1 // pred_region
      %s26 = ssub.s32 2304, 2304
      %27 = vsyncadd [#allocation6], %s26
      %s28 = sshll.u32 [#allocation5], 4
      %s29 = int_to_ptr.vmem [resolvable:$true] %s28
      %34 = dma.hbm_to_vmem [thread:$0]  %s1, 2304, %s29, [#allocation6], 384, 384, 24
    $region9: #{tpu_custom_call.1} parent=1 // pred_fallthru
      _
    // Predicated region
    $region10: #{tpu_custom_call.1} parent=1 // pred_check
      _
    $region11: #{tpu_custom_call.1} parent=1 // pred_check_branch
      %36 = sbr.rel (0) target = $region13
    $region12: #{tpu_custom_call.1} parent=1 // pred_region
      _
    $region13: #{tpu_custom_call.1} parent=1 // pred_fallthru
      _
    // Predicated region
    $region14: #{tpu_custom_call.1} parent=1 // pred_check
      _
    $region15: #{tpu_custom_call.1} parent=1 // pred_check_branch
      %38 = sbr.rel (0) target = $region17
    $region16: #{tpu_custom_call.1} parent=1 // pred_region
      %39 = dma.done [#allocation3], 768
    $region17: #{tpu_custom_call.1} parent=1 // pred_fallthru
      _
    // Predicated region
    $region18: #{tpu_custom_call.1} parent=1 // pred_check
      _
    $region19: #{tpu_custom_call.1} parent=1 // pred_check_branch
      %41 = sbr.rel (0) target = $region21
    $region20: #{tpu_custom_call.1} parent=1 // pred_region
      %42 = dma.done [#allocation6], 2304
    $region21: #{tpu_custom_call.1} parent=1 // pred_fallthru
      _
    %v44 = vld [vmem:[%s2] sm:$0x3f]
    %v45 = vld [vmem:[#allocation2] sm:$0xff]
    %v46 = vpack.c.bf16 %v45, %v45
    %v47 = vld [vmem:[#allocation5] sm:$0xff]
    %v48 = vld [vmem:[#allocation5 + $0x8] sm:$0xff]
    %v49 = vld [vmem:[#allocation5 + $0x10] sm:$0xff]
    %v50 = vld [vmem:[#allocation5 + $0x18] sm:$0xff]
    %v51 = vld [vmem:[#allocation5 + $0x20] sm:$0xff]
    %v52 = vld [vmem:[#allocation5 + $0x28] sm:$0xff]
    %s53 = scalar_lea.vmem [#allocation2], 8
    %v54 = vld [vmem:[%s53] sm:$0xff]
    %v55 = vpack.c.bf16 %v54, %v54
    %s56 = scalar_lea.vmem [#allocation5], 48
    %v57 = vld [vmem:[%s56] sm:$0xff]
    %v58 = vld [vmem:[%s56 + $0x8] sm:$0xff]
    %v59 = vld [vmem:[%s56 + $0x10] sm:$0xff]
    %v60 = vld [vmem:[%s56 + $0x18] sm:$0xff]
    %v61 = vld [vmem:[%s56 + $0x20] sm:$0xff]
    %v62 = vld [vmem:[%s56 + $0x28] sm:$0xff]
    %v69 = vunpack.c.l.b16 %v57
    %v70 = vunpack.c.h.b16 %v57
    %v71 = vunpack.c.l.b16 %v58
    %v72 = vunpack.c.h.b16 %v58
    %v73 = vunpack.c.l.b16 %v59
    %v74 = vunpack.c.h.b16 %v59
    %v75 = vunpack.c.l.b16 %v60
    %v76 = vunpack.c.h.b16 %v60
    %v77 = vunpack.c.l.b16 %v61
    %v78 = vunpack.c.h.b16 %v61
    %v79 = vunpack.c.l.b16 %v62
    %v80 = vunpack.c.h.b16 %v62
    %v81 = vpack.c.b16 %v75, %v69
    %v82 = vpack.c.b16 %v76, %v70
    %v83 = vpack.c.b16 %v77, %v71
    %v84 = vpack.c.b16 %v78, %v72
    %v85 = vpack.c.b16 %v79, %v73
    %v86 = vpack.c.b16 %v80, %v74
    %vm93 = vcmask 130048
    %v95 = vsel %vm93, %v55, 0
    %97 = vmatprep.subr.bf16.mxu0 %v82
    %98 = vmatpush1.bf16.msra.mxu0 %v81
    %99 = vmatprep.subr.bf16.mxu0 0
    %100 = vmatpush1.bf16.msra.mxu0 0
    %101 = vmatprep.subr.bf16.mxu0 0
    %102 = vmatpush1.bf16.msra.mxu0 0
    %103 = vmatprep.subr.bf16.mxu0 0
    %104 = vmatpush1.bf16.msra.mxu0 0
    %105 = vmatprep.subr.bf16.mxu0 0
    %106 = vmatpush1.bf16.msra.mxu0 0
    %107 = vmatprep.subr.bf16.mxu0 0
    %108 = vmatpush1.bf16.msra.mxu0 0
    %109 = vmatprep.subr.bf16.mxu0 0
    %110 = vmatpush1.bf16.msra.mxu0 0
    %111 = vmatprep.subr.bf16.mxu0 0
    %112 = vmatpush1.bf16.msra.mxu0 0
    %113 = vmatprep.subr.bf16.mxu0 0
    %114 = vmatpush1.bf16.msra.mxu0 0
    %115 = vmatprep.subr.bf16.mxu0 0
    %116 = vmatpush1.bf16.msra.mxu0 0
    %117 = vmatprep.subr.bf16.mxu0 0
    %118 = vmatpush1.bf16.msra.mxu0 0
    %119 = vmatprep.subr.bf16.mxu0 0
    %120 = vmatpush1.bf16.msra.mxu0 0
    %121 = vmatprep.subr.bf16.mxu0 0
    %122 = vmatpush1.bf16.msra.mxu0 0
    %123 = vmatprep.subr.bf16.mxu0 0
    %124 = vmatpush1.bf16.msra.mxu0 0
    %125 = vmatprep.subr.bf16.mxu0 0
    %126 = vmatpush1.bf16.msra.mxu0 0
    %127 = vmatprep.subr.bf16.mxu0 0
    %128 = vmatpush1.bf16.msra.mxu0 0
    %129 = vmatprep.mubr.bf16.mxu0 0
    %130 = vmatmul.mubr.bf16.gmra.mrb[0].mxu0 %v95
    %v131 = vpop.f32.mrb[0].mxu0
    %v132 = vadd.f32 0.0, %v131
    %v133 = vpop.f32.mrb[0].mxu0
    %v134 = vadd.f32 0.0, %v133
    %v135 = vpop.f32.mrb[0].mxu0
    %v136 = vpop.f32.mrb[0].mxu0
    %137 = vdwg.mxu0
    %138 = vmatprep.subr.bf16.mxu0 %v84
    %139 = vmatpush1.bf16.msra.mxu0 %v83
    %140 = vmatprep.subr.bf16.mxu0 0
    %141 = vmatpush1.bf16.msra.mxu0 0
    %142 = vmatprep.subr.bf16.mxu0 0
    %143 = vmatpush1.bf16.msra.mxu0 0
    %144 = vmatprep.subr.bf16.mxu0 0
    %145 = vmatpush1.bf16.msra.mxu0 0
    %146 = vmatprep.subr.bf16.mxu0 0
    %147 = vmatpush1.bf16.msra.mxu0 0
    %148 = vmatprep.subr.bf16.mxu0 0
    %149 = vmatpush1.bf16.msra.mxu0 0
    %150 = vmatprep.subr.bf16.mxu0 0
    %151 = vmatpush1.bf16.msra.mxu0 0
    %152 = vmatprep.subr.bf16.mxu0 0
    %153 = vmatpush1.bf16.msra.mxu0 0
    %154 = vmatprep.subr.bf16.mxu0 0
    %155 = vmatpush1.bf16.msra.mxu0 0
    %156 = vmatprep.subr.bf16.mxu0 0
    %157 = vmatpush1.bf16.msra.mxu0 0
    %158 = vmatprep.subr.bf16.mxu0 0
    %159 = vmatpush1.bf16.msra.mxu0 0
    %160 = vmatprep.subr.bf16.mxu0 0
    %161 = vmatpush1.bf16.msra.mxu0 0
    %162 = vmatprep.subr.bf16.mxu0 0
    %163 = vmatpush1.bf16.msra.mxu0 0
    %164 = vmatprep.subr.bf16.mxu0 0
    %165 = vmatpush1.bf16.msra.mxu0 0
    %166 = vmatprep.subr.bf16.mxu0 0
    %167 = vmatpush1.bf16.msra.mxu0 0
    %168 = vmatprep.subr.bf16.mxu0 0
    %169 = vmatpush1.bf16.msra.mxu0 0
    %170 = vmatprep.mubr.bf16.mxu0 0
    %171 = vmatmul.mubr.bf16.gmra.mrb[0].mxu0 %v95
    %v172 = vpop.f32.mrb[0].mxu0
    %v173 = vadd.f32 0.0, %v172
    %v174 = vpop.f32.mrb[0].mxu0
    %v175 = vadd.f32 0.0, %v174
    %v176 = vpop.f32.mrb[0].mxu0
    %v177 = vpop.f32.mrb[0].mxu0
    %178 = vdwg.mxu0
    %179 = vmatprep.subr.bf16.mxu0 %v86
    %180 = vmatpush1.bf16.msra.mxu0 %v85
    %181 = vmatprep.subr.bf16.mxu0 0
    %182 = vmatpush1.bf16.msra.mxu0 0
    %183 = vmatprep.subr.bf16.mxu0 0
    %184 = vmatpush1.bf16.msra.mxu0 0
    %185 = vmatprep.subr.bf16.mxu0 0
    %186 = vmatpush1.bf16.msra.mxu0 0
    %187 = vmatprep.subr.bf16.mxu0 0
    %188 = vmatpush1.bf16.msra.mxu0 0
    %189 = vmatprep.subr.bf16.mxu0 0
    %190 = vmatpush1.bf16.msra.mxu0 0
    %191 = vmatprep.subr.bf16.mxu0 0
    %192 = vmatpush1.bf16.msra.mxu0 0
    %193 = vmatprep.subr.bf16.mxu0 0
    %194 = vmatpush1.bf16.msra.mxu0 0
    %195 = vmatprep.subr.bf16.mxu0 0
    %196 = vmatpush1.bf16.msra.mxu0 0
    %197 = vmatprep.subr.bf16.mxu0 0
    %198 = vmatpush1.bf16.msra.mxu0 0
    %199 = vmatprep.subr.bf16.mxu0 0
    %200 = vmatpush1.bf16.msra.mxu0 0
    %201 = vmatprep.subr.bf16.mxu0 0
    %202 = vmatpush1.bf16.msra.mxu0 0
    %203 = vmatprep.subr.bf16.mxu0 0
    %204 = vmatpush1.bf16.msra.mxu0 0
    %205 = vmatprep.subr.bf16.mxu0 0
    %206 = vmatpush1.bf16.msra.mxu0 0
    %207 = vmatprep.subr.bf16.mxu0 0
    %208 = vmatpush1.bf16.msra.mxu0 0
    %209 = vmatprep.subr.bf16.mxu0 0
    %210 = vmatpush1.bf16.msra.mxu0 0
    %211 = vmatprep.mubr.bf16.mxu0 0
    %212 = vmatmul.mubr.bf16.gmra.mrb[0].mxu0 %v95
    %v213 = vpop.f32.mrb[0].mxu0
    %v214 = vadd.f32 0.0, %v213
    %v215 = vpop.f32.mrb[0].mxu0
    %v216 = vadd.f32 0.0, %v215
    %v217 = vpop.f32.mrb[0].mxu0
    %v218 = vpop.f32.mrb[0].mxu0
    %219 = vdwg.mxu0
    %v226 = vunpack.c.l.b16 %v47
    %v227 = vunpack.c.h.b16 %v47
    %v228 = vunpack.c.l.b16 %v48
    %v229 = vunpack.c.h.b16 %v48
    %v230 = vunpack.c.l.b16 %v49
    %v231 = vunpack.c.h.b16 %v49
    %v232 = vunpack.c.l.b16 %v50
    %v233 = vunpack.c.h.b16 %v50
    %v234 = vunpack.c.l.b16 %v51
    %v235 = vunpack.c.h.b16 %v51
    %v236 = vunpack.c.l.b16 %v52
    %v237 = vunpack.c.h.b16 %v52
    %v238 = vpack.c.b16 %v232, %v226
    %v239 = vpack.c.b16 %v233, %v227
    %v240 = vpack.c.b16 %v234, %v228
    %v241 = vpack.c.b16 %v235, %v229
    %v242 = vpack.c.b16 %v236, %v230
    %v243 = vpack.c.b16 %v237, %v231
    %v251 = vsel %vm93, %v46, 0
    %253 = vmatprep.subr.bf16.mxu0 %v239
    %254 = vmatpush1.bf16.msra.mxu0 %v238
    %255 = vmatprep.subr.bf16.mxu0 0
    %256 = vmatpush1.bf16.msra.mxu0 0
    %257 = vmatprep.subr.bf16.mxu0 0
    %258 = vmatpush1.bf16.msra.mxu0 0
    %259 = vmatprep.subr.bf16.mxu0 0
    %260 = vmatpush1.bf16.msra.mxu0 0
    %261 = vmatprep.subr.bf16.mxu0 0
    %262 = vmatpush1.bf16.msra.mxu0 0
    %263 = vmatprep.subr.bf16.mxu0 0
    %264 = vmatpush1.bf16.msra.mxu0 0
    %265 = vmatprep.subr.bf16.mxu0 0
    %266 = vmatpush1.bf16.msra.mxu0 0
    %267 = vmatprep.subr.bf16.mxu0 0
    %268 = vmatpush1.bf16.msra.mxu0 0
    %269 = vmatprep.subr.bf16.mxu0 0
    %270 = vmatpush1.bf16.msra.mxu0 0
    %271 = vmatprep.subr.bf16.mxu0 0
    %272 = vmatpush1.bf16.msra.mxu0 0
    %273 = vmatprep.subr.bf16.mxu0 0
    %274 = vmatpush1.bf16.msra.mxu0 0
    %275 = vmatprep.subr.bf16.mxu0 0
    %276 = vmatpush1.bf16.msra.mxu0 0
    %277 = vmatprep.subr.bf16.mxu0 0
    %278 = vmatpush1.bf16.msra.mxu0 0
    %279 = vmatprep.subr.bf16.mxu0 0
    %280 = vmatpush1.bf16.msra.mxu0 0
    %281 = vmatprep.subr.bf16.mxu0 0
    %282 = vmatpush1.bf16.msra.mxu0 0
    %283 = vmatprep.subr.bf16.mxu0 0
    %284 = vmatpush1.bf16.msra.mxu0 0
    %285 = vmatprep.mubr.bf16.mxu0 0
    %286 = vmatmul.mubr.bf16.gmra.mrb[0].mxu0 %v251
    %v287 = vpop.f32.mrb[0].mxu0
    %v288 = vadd.f32 %v132, %v287
    %v289 = vpop.f32.mrb[0].mxu0
    %v290 = vadd.f32 %v134, %v289
    %v291 = vpop.f32.mrb[0].mxu0
    %v292 = vpop.f32.mrb[0].mxu0
    %293 = vdwg.mxu0
    %294 = vmatprep.subr.bf16.mxu0 %v241
    %295 = vmatpush1.bf16.msra.mxu0 %v240
    %296 = vmatprep.subr.bf16.mxu0 0
    %297 = vmatpush1.bf16.msra.mxu0 0
    %298 = vmatprep.subr.bf16.mxu0 0
    %299 = vmatpush1.bf16.msra.mxu0 0
    %300 = vmatprep.subr.bf16.mxu0 0
    %301 = vmatpush1.bf16.msra.mxu0 0
    %302 = vmatprep.subr.bf16.mxu0 0
    %303 = vmatpush1.bf16.msra.mxu0 0
    %304 = vmatprep.subr.bf16.mxu0 0
    %305 = vmatpush1.bf16.msra.mxu0 0
    %306 = vmatprep.subr.bf16.mxu0 0
    %307 = vmatpush1.bf16.msra.mxu0 0
    %308 = vmatprep.subr.bf16.mxu0 0
    %309 = vmatpush1.bf16.msra.mxu0 0
    %310 = vmatprep.subr.bf16.mxu0 0
    %311 = vmatpush1.bf16.msra.mxu0 0
    %312 = vmatprep.subr.bf16.mxu0 0
    %313 = vmatpush1.bf16.msra.mxu0 0
    %314 = vmatprep.subr.bf16.mxu0 0
    %315 = vmatpush1.bf16.msra.mxu0 0
    %316 = vmatprep.subr.bf16.mxu0 0
    %317 = vmatpush1.bf16.msra.mxu0 0
    %318 = vmatprep.subr.bf16.mxu0 0
    %319 = vmatpush1.bf16.msra.mxu0 0
    %320 = vmatprep.subr.bf16.mxu0 0
    %321 = vmatpush1.bf16.msra.mxu0 0
    %322 = vmatprep.subr.bf16.mxu0 0
    %323 = vmatpush1.bf16.msra.mxu0 0
    %324 = vmatprep.subr.bf16.mxu0 0
    %325 = vmatpush1.bf16.msra.mxu0 0
    %326 = vmatprep.mubr.bf16.mxu0 0
    %327 = vmatmul.mubr.bf16.gmra.mrb[0].mxu0 %v251
    %v328 = vpop.f32.mrb[0].mxu0
    %v329 = vadd.f32 %v173, %v328
    %v330 = vpop.f32.mrb[0].mxu0
    %v331 = vadd.f32 %v175, %v330
    %v332 = vpop.f32.mrb[0].mxu0
    %v333 = vpop.f32.mrb[0].mxu0
    %334 = vdwg.mxu0
    %335 = vmatprep.subr.bf16.mxu0 %v243
    %336 = vmatpush1.bf16.msra.mxu0 %v242
    %337 = vmatprep.subr.bf16.mxu0 0
    %338 = vmatpush1.bf16.msra.mxu0 0
    %339 = vmatprep.subr.bf16.mxu0 0
    %340 = vmatpush1.bf16.msra.mxu0 0
    %341 = vmatprep.subr.bf16.mxu0 0
    %342 = vmatpush1.bf16.msra.mxu0 0
    %343 = vmatprep.subr.bf16.mxu0 0
    %344 = vmatpush1.bf16.msra.mxu0 0
    %345 = vmatprep.subr.bf16.mxu0 0
    %346 = vmatpush1.bf16.msra.mxu0 0
    %347 = vmatprep.subr.bf16.mxu0 0
    %348 = vmatpush1.bf16.msra.mxu0 0
    %349 = vmatprep.subr.bf16.mxu0 0
    %350 = vmatpush1.bf16.msra.mxu0 0
    %351 = vmatprep.subr.bf16.mxu0 0
    %352 = vmatpush1.bf16.msra.mxu0 0
    %353 = vmatprep.subr.bf16.mxu0 0
    %354 = vmatpush1.bf16.msra.mxu0 0
    %355 = vmatprep.subr.bf16.mxu0 0
    %356 = vmatpush1.bf16.msra.mxu0 0
    %357 = vmatprep.subr.bf16.mxu0 0
    %358 = vmatpush1.bf16.msra.mxu0 0
    %359 = vmatprep.subr.bf16.mxu0 0
    %360 = vmatpush1.bf16.msra.mxu0 0
    %361 = vmatprep.subr.bf16.mxu0 0
    %362 = vmatpush1.bf16.msra.mxu0 0
    %363 = vmatprep.subr.bf16.mxu0 0
    %364 = vmatpush1.bf16.msra.mxu0 0
    %365 = vmatprep.subr.bf16.mxu0 0
    %366 = vmatpush1.bf16.msra.mxu0 0
    %367 = vmatprep.mubr.bf16.mxu0 0
    %368 = vmatmul.mubr.bf16.gmra.mrb[0].mxu0 %v251
    %v369 = vpop.f32.mrb[0].mxu0
    %v370 = vadd.f32 %v214, %v369
    %v371 = vpop.f32.mrb[0].mxu0
    %v372 = vadd.f32 %v216, %v371
    %v373 = vpop.f32.mrb[0].mxu0
    %v374 = vpop.f32.mrb[0].mxu0
    %375 = vdwg.mxu0
    %s376 = scalar_lea.vmem [#allocation2], 16
    %v377 = vld [vmem:[%s376] sm:$0xff]
    %v378 = vpack.c.bf16 %v377, %v377
    %s379 = scalar_lea.vmem [#allocation5], 96
    %v380 = vld [vmem:[%s379] sm:$0xff]
    %v381 = vld [vmem:[%s379 + $0x8] sm:$0xff]
    %v382 = vld [vmem:[%s379 + $0x10] sm:$0xff]
    %v383 = vld [vmem:[%s379 + $0x18] sm:$0xff]
    %v384 = vld [vmem:[%s379 + $0x20] sm:$0xff]
    %v385 = vld [vmem:[%s379 + $0x28] sm:$0xff]
    %v392 = vunpack.c.l.b16 %v380
    %v393 = vunpack.c.h.b16 %v380
    %v394 = vunpack.c.l.b16 %v381
    %v395 = vunpack.c.h.b16 %v381
    %v396 = vunpack.c.l.b16 %v382
    %v397 = vunpack.c.h.b16 %v382
    %v398 = vunpack.c.l.b16 %v383
    %v399 = vunpack.c.h.b16 %v383
    %v400 = vunpack.c.l.b16 %v384
    %v401 = vunpack.c.h.b16 %v384
    %v402 = vunpack.c.l.b16 %v385
    %v403 = vunpack.c.h.b16 %v385
    %v404 = vpack.c.b16 %v398, %v392
    %v405 = vpack.c.b16 %v399, %v393
    %v406 = vpack.c.b16 %v400, %v394
    %v407 = vpack.c.b16 %v401, %v395
    %v408 = vpack.c.b16 %v402, %v396
    %v409 = vpack.c.b16 %v403, %v397
    %v417 = vsel %vm93, %v378, 0
    %419 = vmatprep.subr.bf16.mxu0 %v405
    %420 = vmatpush1.bf16.msra.mxu0 %v404
    %421 = vmatprep.subr.bf16.mxu0 0
    %422 = vmatpush1.bf16.msra.mxu0 0
    %423 = vmatprep.subr.bf16.mxu0 0
    %424 = vmatpush1.bf16.msra.mxu0 0
    %425 = vmatprep.subr.bf16.mxu0 0
    %426 = vmatpush1.bf16.msra.mxu0 0
    %427 = vmatprep.subr.bf16.mxu0 0
    %428 = vmatpush1.bf16.msra.mxu0 0
    %429 = vmatprep.subr.bf16.mxu0 0
    %430 = vmatpush1.bf16.msra.mxu0 0
    %431 = vmatprep.subr.bf16.mxu0 0
    %432 = vmatpush1.bf16.msra.mxu0 0
    %433 = vmatprep.subr.bf16.mxu0 0
    %434 = vmatpush1.bf16.msra.mxu0 0
    %435 = vmatprep.subr.bf16.mxu0 0
    %436 = vmatpush1.bf16.msra.mxu0 0
    %437 = vmatprep.subr.bf16.mxu0 0
    %438 = vmatpush1.bf16.msra.mxu0 0
    %439 = vmatprep.subr.bf16.mxu0 0
    %440 = vmatpush1.bf16.msra.mxu0 0
    %441 = vmatprep.subr.bf16.mxu0 0
    %442 = vmatpush1.bf16.msra.mxu0 0
    %443 = vmatprep.subr.bf16.mxu0 0
    %444 = vmatpush1.bf16.msra.mxu0 0
    %445 = vmatprep.subr.bf16.mxu0 0
    %446 = vmatpush1.bf16.msra.mxu0 0
    %447 = vmatprep.subr.bf16.mxu0 0
    %448 = vmatpush1.bf16.msra.mxu0 0
    %449 = vmatprep.subr.bf16.mxu0 0
    %450 = vmatpush1.bf16.msra.mxu0 0
    %451 = vmatprep.mubr.bf16.mxu0 0
    %452 = vmatmul.mubr.bf16.gmra.mrb[0].mxu0 %v417
    %v453 = vpop.f32.mrb[0].mxu0
    %v454 = vadd.f32 0.0, %v453
    %v455 = vpop.f32.mrb[0].mxu0
    %v456 = vadd.f32 0.0, %v455
    %v457 = vpop.f32.mrb[0].mxu0
    %v458 = vpop.f32.mrb[0].mxu0
    %459 = vdwg.mxu0
    %460 = vmatprep.subr.bf16.mxu0 %v407
    %461 = vmatpush1.bf16.msra.mxu0 %v406
    %462 = vmatprep.subr.bf16.mxu0 0
    %463 = vmatpush1.bf16.msra.mxu0 0
    %464 = vmatprep.subr.bf16.mxu0 0
    %465 = vmatpush1.bf16.msra.mxu0 0
    %466 = vmatprep.subr.bf16.mxu0 0
    %467 = vmatpush1.bf16.msra.mxu0 0
    %468 = vmatprep.subr.bf16.mxu0 0
    %469 = vmatpush1.bf16.msra.mxu0 0
    %470 = vmatprep.subr.bf16.mxu0 0
    %471 = vmatpush1.bf16.msra.mxu0 0
    %472 = vmatprep.subr.bf16.mxu0 0
    %473 = vmatpush1.bf16.msra.mxu0 0
    %474 = vmatprep.subr.bf16.mxu0 0
    %475 = vmatpush1.bf16.msra.mxu0 0
    %476 = vmatprep.subr.bf16.mxu0 0
    %477 = vmatpush1.bf16.msra.mxu0 0
    %478 = vmatprep.subr.bf16.mxu0 0
    %479 = vmatpush1.bf16.msra.mxu0 0
    %480 = vmatprep.subr.bf16.mxu0 0
    %481 = vmatpush1.bf16.msra.mxu0 0
    %482 = vmatprep.subr.bf16.mxu0 0
    %483 = vmatpush1.bf16.msra.mxu0 0
    %484 = vmatprep.subr.bf16.mxu0 0
    %485 = vmatpush1.bf16.msra.mxu0 0
    %486 = vmatprep.subr.bf16.mxu0 0
    %487 = vmatpush1.bf16.msra.mxu0 0
    %488 = vmatprep.subr.bf16.mxu0 0
    %489 = vmatpush1.bf16.msra.mxu0 0
    %490 = vmatprep.subr.bf16.mxu0 0
    %491 = vmatpush1.bf16.msra.mxu0 0
    %492 = vmatprep.mubr.bf16.mxu0 0
    %493 = vmatmul.mubr.bf16.gmra.mrb[0].mxu0 %v417
    %v494 = vpop.f32.mrb[0].mxu0
    %v495 = vadd.f32 0.0, %v494
    %v496 = vpop.f32.mrb[0].mxu0
    %v497 = vadd.f32 0.0, %v496
    %v498 = vpop.f32.mrb[0].mxu0
    %v499 = vpop.f32.mrb[0].mxu0
    %500 = vdwg.mxu0
    %501 = vmatprep.subr.bf16.mxu0 %v409
    %502 = vmatpush1.bf16.msra.mxu0 %v408
    %503 = vmatprep.subr.bf16.mxu0 0
    %504 = vmatpush1.bf16.msra.mxu0 0
    %505 = vmatprep.subr.bf16.mxu0 0
    %506 = vmatpush1.bf16.msra.mxu0 0
    %507 = vmatprep.subr.bf16.mxu0 0
    %508 = vmatpush1.bf16.msra.mxu0 0
    %509 = vmatprep.subr.bf16.mxu0 0
    %510 = vmatpush1.bf16.msra.mxu0 0
    %511 = vmatprep.subr.bf16.mxu0 0
    %512 = vmatpush1.bf16.msra.mxu0 0
    %513 = vmatprep.subr.bf16.mxu0 0
    %514 = vmatpush1.bf16.msra.mxu0 0
    %515 = vmatprep.subr.bf16.mxu0 0
    %516 = vmatpush1.bf16.msra.mxu0 0
    %517 = vmatprep.subr.bf16.mxu0 0
    %518 = vmatpush1.bf16.msra.mxu0 0
    %519 = vmatprep.subr.bf16.mxu0 0
    %520 = vmatpush1.bf16.msra.mxu0 0
    %521 = vmatprep.subr.bf16.mxu0 0
    %522 = vmatpush1.bf16.msra.mxu0 0
    %523 = vmatprep.subr.bf16.mxu0 0
    %524 = vmatpush1.bf16.msra.mxu0 0
    %525 = vmatprep.subr.bf16.mxu0 0
    %526 = vmatpush1.bf16.msra.mxu0 0
    %527 = vmatprep.subr.bf16.mxu0 0
    %528 = vmatpush1.bf16.msra.mxu0 0
    %529 = vmatprep.subr.bf16.mxu0 0
    %530 = vmatpush1.bf16.msra.mxu0 0
    %531 = vmatprep.subr.bf16.mxu0 0
    %532 = vmatpush1.bf16.msra.mxu0 0
    %533 = vmatprep.mubr.bf16.mxu0 0
    %534 = vmatmul.mubr.bf16.gmra.mrb[0].mxu0 %v417
    %v535 = vpop.f32.mrb[0].mxu0
    %v536 = vadd.f32 0.0, %v535
    %v537 = vpop.f32.mrb[0].mxu0
    %v538 = vadd.f32 0.0, %v537
    %v539 = vpop.f32.mrb[0].mxu0
    %v540 = vpop.f32.mrb[0].mxu0
    %541 = vdwg.mxu0
    %v542 = vadd.f32 %v288, %v454
    %v543 = vadd.f32 %v290, %v456
    %v544 = vadd.f32 %v329, %v495
    %v545 = vadd.f32 %v331, %v497
    %v546 = vadd.f32 %v370, %v536
    %v547 = vadd.f32 %v372, %v538
    %v549 = vlaneseq
    %v550 = vshrl.u32 %v549, 7
    %v551 = vsub.s32 0, %v550
    %v552 = vrot.slane %v44, %v551
    %v553 = vlaneseq
    %v554 = vshrl.u32 %v553, 7
    %v555 = vsub.s32 1, %v554
    %v556 = vrot.slane %v44, %v555
    %v557 = vlaneseq
    %v558 = vshrl.u32 %v557, 7
    %v559 = vsub.s32 2, %v558
    %v560 = vrot.slane %v44, %v559
    %v561 = vlaneseq
    %v562 = vshrl.u32 %v561, 7
    %v563 = vsub.s32 3, %v562
    %v564 = vrot.slane %v44, %v563
    %v565 = vlaneseq
    %v566 = vshrl.u32 %v565, 7
    %v567 = vsub.s32 4, %v566
    %v568 = vrot.slane %v44, %v567
    %v569 = vlaneseq
    %v570 = vshrl.u32 %v569, 7
    %v571 = vsub.s32 5, %v570
    %v572 = vrot.slane %v44, %v571
    %v579 = vadd.f32 %v542, %v552
    %v580 = vadd.f32 %v543, %v556
    %v581 = vadd.f32 %v544, %v560
    %v582 = vadd.f32 %v545, %v564
    %v583 = vadd.f32 %v546, %v568
    %v584 = vadd.f32 %v547, %v572
    %585 = vst [vmem:[#allocation7] sm:$0xff] %v579
    %586 = vst [vmem:[#allocation7 + $0x8] sm:$0xff] %v580
    %587 = vst [vmem:[#allocation7 + $0x10] sm:$0xff] %v581
    %588 = vst [vmem:[#allocation7 + $0x18] sm:$0xff] %v582
    %589 = vst [vmem:[#allocation7 + $0x20] sm:$0xff] %v583
    %590 = vst [vmem:[#allocation7 + $0x28] sm:$0xff] %v584
    %s591 = scalar_lea.vmem [#allocation2], 24
    %v592 = vld [vmem:[%s591] sm:$0xff]
    %v593 = vpack.c.bf16 %v592, %v592
    %v594 = vld [vmem:[#allocation5] sm:$0xff]
    %v595 = vld [vmem:[#allocation5 + $0x8] sm:$0xff]
    %v596 = vld [vmem:[#allocation5 + $0x10] sm:$0xff]
    %v597 = vld [vmem:[#allocation5 + $0x18] sm:$0xff]
    %v598 = vld [vmem:[#allocation5 + $0x20] sm:$0xff]
    %v599 = vld [vmem:[#allocation5 + $0x28] sm:$0xff]
    %s600 = scalar_lea.vmem [#allocation2], 32
    %v601 = vld [vmem:[%s600] sm:$0xff]
    %v602 = vpack.c.bf16 %v601, %v601
    %v603 = vld [vmem:[%s56] sm:$0xff]
    %v604 = vld [vmem:[%s56 + $0x8] sm:$0xff]
    %v605 = vld [vmem:[%s56 + $0x10] sm:$0xff]
    %v606 = vld [vmem:[%s56 + $0x18] sm:$0xff]
    %v607 = vld [vmem:[%s56 + $0x20] sm:$0xff]
    %v608 = vld [vmem:[%s56 + $0x28] sm:$0xff]
    %v615 = vunpack.c.l.b16 %v603
    %v616 = vunpack.c.h.b16 %v603
    %v617 = vunpack.c.l.b16 %v604
    %v618 = vunpack.c.h.b16 %v604
    %v619 = vunpack.c.l.b16 %v605
    %v620 = vunpack.c.h.b16 %v605
    %v621 = vunpack.c.l.b16 %v606
    %v622 = vunpack.c.h.b16 %v606
    %v623 = vunpack.c.l.b16 %v607
    %v624 = vunpack.c.h.b16 %v607
    %v625 = vunpack.c.l.b16 %v608
    %v626 = vunpack.c.h.b16 %v608
    %v627 = vpack.c.b16 %v621, %v615
    %v628 = vpack.c.b16 %v622, %v616
    %v629 = vpack.c.b16 %v623, %v617
    %v630 = vpack.c.b16 %v624, %v618
    %v631 = vpack.c.b16 %v625, %v619
    %v632 = vpack.c.b16 %v626, %v620
    %v640 = vsel %vm93, %v602, 0
    %642 = vmatprep.subr.bf16.mxu0 %v628
    %643 = vmatpush1.bf16.msra.mxu0 %v627
    %644 = vmatprep.subr.bf16.mxu0 0
    %645 = vmatpush1.bf16.msra.mxu0 0
    %646 = vmatprep.subr.bf16.mxu0 0
    %647 = vmatpush1.bf16.msra.mxu0 0
    %648 = vmatprep.subr.bf16.mxu0 0
    %649 = vmatpush1.bf16.msra.mxu0 0
    %650 = vmatprep.subr.bf16.mxu0 0
    %651 = vmatpush1.bf16.msra.mxu0 0
    %652 = vmatprep.subr.bf16.mxu0 0
    %653 = vmatpush1.bf16.msra.mxu0 0
    %654 = vmatprep.subr.bf16.mxu0 0
    %655 = vmatpush1.bf16.msra.mxu0 0
    %656 = vmatprep.subr.bf16.mxu0 0
    %657 = vmatpush1.bf16.msra.mxu0 0
    %658 = vmatprep.subr.bf16.mxu0 0
    %659 = vmatpush1.bf16.msra.mxu0 0
    %660 = vmatprep.subr.bf16.mxu0 0
    %661 = vmatpush1.bf16.msra.mxu0 0
    %662 = vmatprep.subr.bf16.mxu0 0
    %663 = vmatpush1.bf16.msra.mxu0 0
    %664 = vmatprep.subr.bf16.mxu0 0
    %665 = vmatpush1.bf16.msra.mxu0 0
    %666 = vmatprep.subr.bf16.mxu0 0
    %667 = vmatpush1.bf16.msra.mxu0 0
    %668 = vmatprep.subr.bf16.mxu0 0
    %669 = vmatpush1.bf16.msra.mxu0 0
    %670 = vmatprep.subr.bf16.mxu0 0
    %671 = vmatpush1.bf16.msra.mxu0 0
    %672 = vmatprep.subr.bf16.mxu0 0
    %673 = vmatpush1.bf16.msra.mxu0 0
    %674 = vmatprep.mubr.bf16.mxu0 0
    %675 = vmatmul.mubr.bf16.gmra.mrb[0].mxu0 %v640
    %v676 = vpop.f32.mrb[0].mxu0
    %v677 = vadd.f32 0.0, %v676
    %v678 = vpop.f32.mrb[0].mxu0
    %v679 = vadd.f32 0.0, %v678
    %v680 = vpop.f32.mrb[0].mxu0
    %v681 = vpop.f32.mrb[0].mxu0
    %682 = vdwg.mxu0
    %683 = vmatprep.subr.bf16.mxu0 %v630
    %684 = vmatpush1.bf16.msra.mxu0 %v629
    %685 = vmatprep.subr.bf16.mxu0 0
    %686 = vmatpush1.bf16.msra.mxu0 0
    %687 = vmatprep.subr.bf16.mxu0 0
    %688 = vmatpush1.bf16.msra.mxu0 0
    %689 = vmatprep.subr.bf16.mxu0 0
    %690 = vmatpush1.bf16.msra.mxu0 0
    %691 = vmatprep.subr.bf16.mxu0 0
    %692 = vmatpush1.bf16.msra.mxu0 0
    %693 = vmatprep.subr.bf16.mxu0 0
    %694 = vmatpush1.bf16.msra.mxu0 0
    %695 = vmatprep.subr.bf16.mxu0 0
    %696 = vmatpush1.bf16.msra.mxu0 0
    %697 = vmatprep.subr.bf16.mxu0 0
    %698 = vmatpush1.bf16.msra.mxu0 0
    %699 = vmatprep.subr.bf16.mxu0 0
    %700 = vmatpush1.bf16.msra.mxu0 0
    %701 = vmatprep.subr.bf16.mxu0 0
    %702 = vmatpush1.bf16.msra.mxu0 0
    %703 = vmatprep.subr.bf16.mxu0 0
    %704 = vmatpush1.bf16.msra.mxu0 0
    %705 = vmatprep.subr.bf16.mxu0 0
    %706 = vmatpush1.bf16.msra.mxu0 0
    %707 = vmatprep.subr.bf16.mxu0 0
    %708 = vmatpush1.bf16.msra.mxu0 0
    %709 = vmatprep.subr.bf16.mxu0 0
    %710 = vmatpush1.bf16.msra.mxu0 0
    %711 = vmatprep.subr.bf16.mxu0 0
    %712 = vmatpush1.bf16.msra.mxu0 0
    %713 = vmatprep.subr.bf16.mxu0 0
    %714 = vmatpush1.bf16.msra.mxu0 0
    %715 = vmatprep.mubr.bf16.mxu0 0
    %716 = vmatmul.mubr.bf16.gmra.mrb[0].mxu0 %v640
    %v717 = vpop.f32.mrb[0].mxu0
    %v718 = vadd.f32 0.0, %v717
    %v719 = vpop.f32.mrb[0].mxu0
    %v720 = vadd.f32 0.0, %v719
    %v721 = vpop.f32.mrb[0].mxu0
    %v722 = vpop.f32.mrb[0].mxu0
    %723 = vdwg.mxu0
    %724 = vmatprep.subr.bf16.mxu0 %v632
    %725 = vmatpush1.bf16.msra.mxu0 %v631
    %726 = vmatprep.subr.bf16.mxu0 0
    %727 = vmatpush1.bf16.msra.mxu0 0
    %728 = vmatprep.subr.bf16.mxu0 0
    %729 = vmatpush1.bf16.msra.mxu0 0
    %730 = vmatprep.subr.bf16.mxu0 0
    %731 = vmatpush1.bf16.msra.mxu0 0
    %732 = vmatprep.subr.bf16.mxu0 0
    %733 = vmatpush1.bf16.msra.mxu0 0
    %734 = vmatprep.subr.bf16.mxu0 0
    %735 = vmatpush1.bf16.msra.mxu0 0
    %736 = vmatprep.subr.bf16.mxu0 0
    %737 = vmatpush1.bf16.msra.mxu0 0
    %738 = vmatprep.subr.bf16.mxu0 0
    %739 = vmatpush1.bf16.msra.mxu0 0
    %740 = vmatprep.subr.bf16.mxu0 0
    %741 = vmatpush1.bf16.msra.mxu0 0
    %742 = vmatprep.subr.bf16.mxu0 0
    %743 = vmatpush1.bf16.msra.mxu0 0
    %744 = vmatprep.subr.bf16.mxu0 0
    %745 = vmatpush1.bf16.msra.mxu0 0
    %746 = vmatprep.subr.bf16.mxu0 0
    %747 = vmatpush1.bf16.msra.mxu0 0
    %748 = vmatprep.subr.bf16.mxu0 0
    %749 = vmatpush1.bf16.msra.mxu0 0
    %750 = vmatprep.subr.bf16.mxu0 0
    %751 = vmatpush1.bf16.msra.mxu0 0
    %752 = vmatprep.subr.bf16.mxu0 0
    %753 = vmatpush1.bf16.msra.mxu0 0
    %754 = vmatprep.subr.bf16.mxu0 0
    %755 = vmatpush1.bf16.msra.mxu0 0
    %756 = vmatprep.mubr.bf16.mxu0 0
    %757 = vmatmul.mubr.bf16.gmra.mrb[0].mxu0 %v640
    %v758 = vpop.f32.mrb[0].mxu0
    %v759 = vadd.f32 0.0, %v758
    %v760 = vpop.f32.mrb[0].mxu0
    %v761 = vadd.f32 0.0, %v760
    %v762 = vpop.f32.mrb[0].mxu0
    %v763 = vpop.f32.mrb[0].mxu0
    %764 = vdwg.mxu0
    %v771 = vunpack.c.l.b16 %v594
    %v772 = vunpack.c.h.b16 %v594
    %v773 = vunpack.c.l.b16 %v595
    %v774 = vunpack.c.h.b16 %v595
    %v775 = vunpack.c.l.b16 %v596
    %v776 = vunpack.c.h.b16 %v596
    %v777 = vunpack.c.l.b16 %v597
    %v778 = vunpack.c.h.b16 %v597
    %v779 = vunpack.c.l.b16 %v598
    %v780 = vunpack.c.h.b16 %v598
    %v781 = vunpack.c.l.b16 %v599
    %v782 = vunpack.c.h.b16 %v599
    %v783 = vpack.c.b16 %v777, %v771
    %v784 = vpack.c.b16 %v778, %v772
    %v785 = vpack.c.b16 %v779, %v773
    %v786 = vpack.c.b16 %v780, %v774
    %v787 = vpack.c.b16 %v781, %v775
    %v788 = vpack.c.b16 %v782, %v776
    %v796 = vsel %vm93, %v593, 0
    %798 = vmatprep.subr.bf16.mxu0 %v784
    %799 = vmatpush1.bf16.msra.mxu0 %v783
    %800 = vmatprep.subr.bf16.mxu0 0
    %801 = vmatpush1.bf16.msra.mxu0 0
    %802 = vmatprep.subr.bf16.mxu0 0
    %803 = vmatpush1.bf16.msra.mxu0 0
    %804 = vmatprep.subr.bf16.mxu0 0
    %805 = vmatpush1.bf16.msra.mxu0 0
    %806 = vmatprep.subr.bf16.mxu0 0
    %807 = vmatpush1.bf16.msra.mxu0 0
    %808 = vmatprep.subr.bf16.mxu0 0
    %809 = vmatpush1.bf16.msra.mxu0 0
    %810 = vmatprep.subr.bf16.mxu0 0
    %811 = vmatpush1.bf16.msra.mxu0 0
    %812 = vmatprep.subr.bf16.mxu0 0
    %813 = vmatpush1.bf16.msra.mxu0 0
    %814 = vmatprep.subr.bf16.mxu0 0
    %815 = vmatpush1.bf16.msra.mxu0 0
    %816 = vmatprep.subr.bf16.mxu0 0
    %817 = vmatpush1.bf16.msra.mxu0 0
    %818 = vmatprep.subr.bf16.mxu0 0
    %819 = vmatpush1.bf16.msra.mxu0 0
    %820 = vmatprep.subr.bf16.mxu0 0
    %821 = vmatpush1.bf16.msra.mxu0 0
    %822 = vmatprep.subr.bf16.mxu0 0
    %823 = vmatpush1.bf16.msra.mxu0 0
    %824 = vmatprep.subr.bf16.mxu0 0
    %825 = vmatpush1.bf16.msra.mxu0 0
    %826 = vmatprep.subr.bf16.mxu0 0
    %827 = vmatpush1.bf16.msra.mxu0 0
    %828 = vmatprep.subr.bf16.mxu0 0
    %829 = vmatpush1.bf16.msra.mxu0 0
    %830 = vmatprep.mubr.bf16.mxu0 0
    %831 = vmatmul.mubr.bf16.gmra.mrb[0].mxu0 %v796
    %v832 = vpop.f32.mrb[0].mxu0
    %v833 = vadd.f32 %v677, %v832
    %v834 = vpop.f32.mrb[0].mxu0
    %v835 = vadd.f32 %v679, %v834
    %v836 = vpop.f32.mrb[0].mxu0
    %v837 = vpop.f32.mrb[0].mxu0
    %838 = vdwg.mxu0
    %839 = vmatprep.subr.bf16.mxu0 %v786
    %840 = vmatpush1.bf16.msra.mxu0 %v785
    %841 = vmatprep.subr.bf16.mxu0 0
    %842 = vmatpush1.bf16.msra.mxu0 0
    %843 = vmatprep.subr.bf16.mxu0 0
    %844 = vmatpush1.bf16.msra.mxu0 0
    %845 = vmatprep.subr.bf16.mxu0 0
    %846 = vmatpush1.bf16.msra.mxu0 0
    %847 = vmatprep.subr.bf16.mxu0 0
    %848 = vmatpush1.bf16.msra.mxu0 0
    %849 = vmatprep.subr.bf16.mxu0 0
    %850 = vmatpush1.bf16.msra.mxu0 0
    %851 = vmatprep.subr.bf16.mxu0 0
    %852 = vmatpush1.bf16.msra.mxu0 0
    %853 = vmatprep.subr.bf16.mxu0 0
    %854 = vmatpush1.bf16.msra.mxu0 0
    %855 = vmatprep.subr.bf16.mxu0 0
    %856 = vmatpush1.bf16.msra.mxu0 0
    %857 = vmatprep.subr.bf16.mxu0 0
    %858 = vmatpush1.bf16.msra.mxu0 0
    %859 = vmatprep.subr.bf16.mxu0 0
    %860 = vmatpush1.bf16.msra.mxu0 0
    %861 = vmatprep.subr.bf16.mxu0 0
    %862 = vmatpush1.bf16.msra.mxu0 0
    %863 = vmatprep.subr.bf16.mxu0 0
    %864 = vmatpush1.bf16.msra.mxu0 0
    %865 = vmatprep.subr.bf16.mxu0 0
    %866 = vmatpush1.bf16.msra.mxu0 0
    %867 = vmatprep.subr.bf16.mxu0 0
    %868 = vmatpush1.bf16.msra.mxu0 0
    %869 = vmatprep.subr.bf16.mxu0 0
    %870 = vmatpush1.bf16.msra.mxu0 0
    %871 = vmatprep.mubr.bf16.mxu0 0
    %872 = vmatmul.mubr.bf16.gmra.mrb[0].mxu0 %v796
    %v873 = vpop.f32.mrb[0].mxu0
    %v874 = vadd.f32 %v718, %v873
    %v875 = vpop.f32.mrb[0].mxu0
    %v876 = vadd.f32 %v720, %v875
    %v877 = vpop.f32.mrb[0].mxu0
    %v878 = vpop.f32.mrb[0].mxu0
    %879 = vdwg.mxu0
    %880 = vmatprep.subr.bf16.mxu0 %v788
    %881 = vmatpush1.bf16.msra.mxu0 %v787
    %882 = vmatprep.subr.bf16.mxu0 0
    %883 = vmatpush1.bf16.msra.mxu0 0
    %884 = vmatprep.subr.bf16.mxu0 0
    %885 = vmatpush1.bf16.msra.mxu0 0
    %886 = vmatprep.subr.bf16.mxu0 0
    %887 = vmatpush1.bf16.msra.mxu0 0
    %888 = vmatprep.subr.bf16.mxu0 0
    %889 = vmatpush1.bf16.msra.mxu0 0
    %890 = vmatprep.subr.bf16.mxu0 0
    %891 = vmatpush1.bf16.msra.mxu0 0
    %892 = vmatprep.subr.bf16.mxu0 0
    %893 = vmatpush1.bf16.msra.mxu0 0
    %894 = vmatprep.subr.bf16.mxu0 0
    %895 = vmatpush1.bf16.msra.mxu0 0
    %896 = vmatprep.subr.bf16.mxu0 0
    %897 = vmatpush1.bf16.msra.mxu0 0
    %898 = vmatprep.subr.bf16.mxu0 0
    %899 = vmatpush1.bf16.msra.mxu0 0
    %900 = vmatprep.subr.bf16.mxu0 0
    %901 = vmatpush1.bf16.msra.mxu0 0
    %902 = vmatprep.subr.bf16.mxu0 0
    %903 = vmatpush1.bf16.msra.mxu0 0
    %904 = vmatprep.subr.bf16.mxu0 0
    %905 = vmatpush1.bf16.msra.mxu0 0
    %906 = vmatprep.subr.bf16.mxu0 0
    %907 = vmatpush1.bf16.msra.mxu0 0
    %908 = vmatprep.subr.bf16.mxu0 0
    %909 = vmatpush1.bf16.msra.mxu0 0
    %910 = vmatprep.subr.bf16.mxu0 0
    %911 = vmatpush1.bf16.msra.mxu0 0
    %912 = vmatprep.mubr.bf16.mxu0 0
    %913 = vmatmul.mubr.bf16.gmra.mrb[0].mxu0 %v796
    %v914 = vpop.f32.mrb[0].mxu0
    %v915 = vadd.f32 %v759, %v914
    %v916 = vpop.f32.mrb[0].mxu0
    %v917 = vadd.f32 %v761, %v916
    %v918 = vpop.f32.mrb[0].mxu0
    %v919 = vpop.f32.mrb[0].mxu0
    %920 = vdwg.mxu0
    %s921 = scalar_lea.vmem [#allocation2], 40
    %v922 = vld [vmem:[%s921] sm:$0xff]
    %v923 = vpack.c.bf16 %v922, %v922
    %v924 = vld [vmem:[%s379] sm:$0xff]
    %v925 = vld [vmem:[%s379 + $0x8] sm:$0xff]
    %v926 = vld [vmem:[%s379 + $0x10] sm:$0xff]
    %v927 = vld [vmem:[%s379 + $0x18] sm:$0xff]
    %v928 = vld [vmem:[%s379 + $0x20] sm:$0xff]
    %v929 = vld [vmem:[%s379 + $0x28] sm:$0xff]
    %v936 = vunpack.c.l.b16 %v924
    %v937 = vunpack.c.h.b16 %v924
    %v938 = vunpack.c.l.b16 %v925
    %v939 = vunpack.c.h.b16 %v925
    %v940 = vunpack.c.l.b16 %v926
    %v941 = vunpack.c.h.b16 %v926
    %v942 = vunpack.c.l.b16 %v927
    %v943 = vunpack.c.h.b16 %v927
    %v944 = vunpack.c.l.b16 %v928
    %v945 = vunpack.c.h.b16 %v928
    %v946 = vunpack.c.l.b16 %v929
    %v947 = vunpack.c.h.b16 %v929
    %v948 = vpack.c.b16 %v942, %v936
    %v949 = vpack.c.b16 %v943, %v937
    %v950 = vpack.c.b16 %v944, %v938
    %v951 = vpack.c.b16 %v945, %v939
    %v952 = vpack.c.b16 %v946, %v940
    %v953 = vpack.c.b16 %v947, %v941
    %v961 = vsel %vm93, %v923, 0
    %963 = vmatprep.subr.bf16.mxu0 %v949
    %964 = vmatpush1.bf16.msra.mxu0 %v948
    %965 = vmatprep.subr.bf16.mxu0 0
    %966 = vmatpush1.bf16.msra.mxu0 0
    %967 = vmatprep.subr.bf16.mxu0 0
    %968 = vmatpush1.bf16.msra.mxu0 0
    %969 = vmatprep.subr.bf16.mxu0 0
    %970 = vmatpush1.bf16.msra.mxu0 0
    %971 = vmatprep.subr.bf16.mxu0 0
    %972 = vmatpush1.bf16.msra.mxu0 0
    %973 = vmatprep.subr.bf16.mxu0 0
    %974 = vmatpush1.bf16.msra.mxu0 0
    %975 = vmatprep.subr.bf16.mxu0 0
    %976 = vmatpush1.bf16.msra.mxu0 0
    %977 = vmatprep.subr.bf16.mxu0 0
    %978 = vmatpush1.bf16.msra.mxu0 0
    %979 = vmatprep.subr.bf16.mxu0 0
    %980 = vmatpush1.bf16.msra.mxu0 0
    %981 = vmatprep.subr.bf16.mxu0 0
    %982 = vmatpush1.bf16.msra.mxu0 0
    %983 = vmatprep.subr.bf16.mxu0 0
    %984 = vmatpush1.bf16.msra.mxu0 0
    %985 = vmatprep.subr.bf16.mxu0 0
    %986 = vmatpush1.bf16.msra.mxu0 0
    %987 = vmatprep.subr.bf16.mxu0 0
    %988 = vmatpush1.bf16.msra.mxu0 0
    %989 = vmatprep.subr.bf16.mxu0 0
    %990 = vmatpush1.bf16.msra.mxu0 0
    %991 = vmatprep.subr.bf16.mxu0 0
    %992 = vmatpush1.bf16.msra.mxu0 0
    %993 = vmatprep.subr.bf16.mxu0 0
    %994 = vmatpush1.bf16.msra.mxu0 0
    %995 = vmatprep.mubr.bf16.mxu0 0
    %996 = vmatmul.mubr.bf16.gmra.mrb[0].mxu0 %v961
    %v997 = vpop.f32.mrb[0].mxu0
    %v998 = vadd.f32 0.0, %v997
    %v999 = vpop.f32.mrb[0].mxu0
    %v1000 = vadd.f32 0.0, %v999
    %v1001 = vpop.f32.mrb[0].mxu0
    %v1002 = vpop.f32.mrb[0].mxu0
    %1003 = vdwg.mxu0
    %1004 = vmatprep.subr.bf16.mxu0 %v951
    %1005 = vmatpush1.bf16.msra.mxu0 %v950
    %1006 = vmatprep.subr.bf16.mxu0 0
    %1007 = vmatpush1.bf16.msra.mxu0 0
    %1008 = vmatprep.subr.bf16.mxu0 0
    %1009 = vmatpush1.bf16.msra.mxu0 0
    %1010 = vmatprep.subr.bf16.mxu0 0
    %1011 = vmatpush1.bf16.msra.mxu0 0
    %1012 = vmatprep.subr.bf16.mxu0 0
    %1013 = vmatpush1.bf16.msra.mxu0 0
    %1014 = vmatprep.subr.bf16.mxu0 0
    %1015 = vmatpush1.bf16.msra.mxu0 0
    %1016 = vmatprep.subr.bf16.mxu0 0
    %1017 = vmatpush1.bf16.msra.mxu0 0
    %1018 = vmatprep.subr.bf16.mxu0 0
    %1019 = vmatpush1.bf16.msra.mxu0 0
    %1020 = vmatprep.subr.bf16.mxu0 0
    %1021 = vmatpush1.bf16.msra.mxu0 0
    %1022 = vmatprep.subr.bf16.mxu0 0
    %1023 = vmatpush1.bf16.msra.mxu0 0
    %1024 = vmatprep.subr.bf16.mxu0 0
    %1025 = vmatpush1.bf16.msra.mxu0 0
    %1026 = vmatprep.subr.bf16.mxu0 0
    %1027 = vmatpush1.bf16.msra.mxu0 0
    %1028 = vmatprep.subr.bf16.mxu0 0
    %1029 = vmatpush1.bf16.msra.mxu0 0
    %1030 = vmatprep.subr.bf16.mxu0 0
    %1031 = vmatpush1.bf16.msra.mxu0 0
    %1032 = vmatprep.subr.bf16.mxu0 0
    %1033 = vmatpush1.bf16.msra.mxu0 0
    %1034 = vmatprep.subr.bf16.mxu0 0
    %1035 = vmatpush1.bf16.msra.mxu0 0
    %1036 = vmatprep.mubr.bf16.mxu0 0
    %1037 = vmatmul.mubr.bf16.gmra.mrb[0].mxu0 %v961
    %v1038 = vpop.f32.mrb[0].mxu0
    %v1039 = vadd.f32 0.0, %v1038
    %v1040 = vpop.f32.mrb[0].mxu0
    %v1041 = vadd.f32 0.0, %v1040
    %v1042 = vpop.f32.mrb[0].mxu0
    %v1043 = vpop.f32.mrb[0].mxu0
    %1044 = vdwg.mxu0
    %1045 = vmatprep.subr.bf16.mxu0 %v953
    %1046 = vmatpush1.bf16.msra.mxu0 %v952
    %1047 = vmatprep.subr.bf16.mxu0 0
    %1048 = vmatpush1.bf16.msra.mxu0 0
    %1049 = vmatprep.subr.bf16.mxu0 0
    %1050 = vmatpush1.bf16.msra.mxu0 0
    %1051 = vmatprep.subr.bf16.mxu0 0
    %1052 = vmatpush1.bf16.msra.mxu0 0
    %1053 = vmatprep.subr.bf16.mxu0 0
    %1054 = vmatpush1.bf16.msra.mxu0 0
    %1055 = vmatprep.subr.bf16.mxu0 0
    %1056 = vmatpush1.bf16.msra.mxu0 0
    %1057 = vmatprep.subr.bf16.mxu0 0
    %1058 = vmatpush1.bf16.msra.mxu0 0
    %1059 = vmatprep.subr.bf16.mxu0 0
    %1060 = vmatpush1.bf16.msra.mxu0 0
    %1061 = vmatprep.subr.bf16.mxu0 0
    %1062 = vmatpush1.bf16.msra.mxu0 0
    %1063 = vmatprep.subr.bf16.mxu0 0
    %1064 = vmatpush1.bf16.msra.mxu0 0
    %1065 = vmatprep.subr.bf16.mxu0 0
    %1066 = vmatpush1.bf16.msra.mxu0 0
    %1067 = vmatprep.subr.bf16.mxu0 0
    %1068 = vmatpush1.bf16.msra.mxu0 0
    %1069 = vmatprep.subr.bf16.mxu0 0
    %1070 = vmatpush1.bf16.msra.mxu0 0
    %1071 = vmatprep.subr.bf16.mxu0 0
    %1072 = vmatpush1.bf16.msra.mxu0 0
    %1073 = vmatprep.subr.bf16.mxu0 0
    %1074 = vmatpush1.bf16.msra.mxu0 0
    %1075 = vmatprep.subr.bf16.mxu0 0
    %1076 = vmatpush1.bf16.msra.mxu0 0
    %1077 = vmatprep.mubr.bf16.mxu0 0
    %1078 = vmatmul.mubr.bf16.gmra.mrb[0].mxu0 %v961
    %v1079 = vpop.f32.mrb[0].mxu0
    %v1080 = vadd.f32 0.0, %v1079
    %v1081 = vpop.f32.mrb[0].mxu0
    %v1082 = vadd.f32 0.0, %v1081
    %v1083 = vpop.f32.mrb[0].mxu0
    %v1084 = vpop.f32.mrb[0].mxu0
    %1085 = vdwg.mxu0
    %v1086 = vadd.f32 %v833, %v998
    %v1087 = vadd.f32 %v835, %v1000
    %v1088 = vadd.f32 %v874, %v1039
    %v1089 = vadd.f32 %v876, %v1041
    %v1090 = vadd.f32 %v915, %v1080
    %v1091 = vadd.f32 %v917, %v1082
    %v1092 = vadd.f32 %v1086, %v552
    %v1093 = vadd.f32 %v1087, %v556
    %v1094 = vadd.f32 %v1088, %v560
    %v1095 = vadd.f32 %v1089, %v564
    %v1096 = vadd.f32 %v1090, %v568
    %v1097 = vadd.f32 %v1091, %v572
    %s1098 = scalar_lea.vmem [#allocation7], 48
    %1099 = vst [vmem:[%s1098] sm:$0xff] %v1092
    %1100 = vst [vmem:[%s1098 + $0x8] sm:$0xff] %v1093
    %1101 = vst [vmem:[%s1098 + $0x10] sm:$0xff] %v1094
    %1102 = vst [vmem:[%s1098 + $0x18] sm:$0xff] %v1095
    %1103 = vst [vmem:[%s1098 + $0x20] sm:$0xff] %v1096
    %1104 = vst [vmem:[%s1098 + $0x28] sm:$0xff] %v1097
    // Predicated region
    $region22: #{tpu_custom_call.1} parent=1 // pred_check
      _
    $region23: #{tpu_custom_call.1} parent=1 // pred_check_branch
      %1106 = sbr.rel (0) target = $region25
    $region24: #{tpu_custom_call.1} parent=1 // pred_region
      %s1108 = ssub.s32 1536, 1536
      %1109 = vsyncadd [#allocation4], %s1108
      %s1110 = sshll.u32 [#allocation7], 4
      %s1111 = int_to_ptr.vmem [resolvable:$true] %s1110
      %1116 = dma.vmem_to_hbm [thread:$0]  %s1111, 1536, %s3, [#allocation4], 768, 768, 48
    $region25: #{tpu_custom_call.1} parent=1 // pred_fallthru
      _
    // Predicated region
    $region26: #{tpu_custom_call.1} parent=1 // pred_check
      _
    $region27: #{tpu_custom_call.1} parent=1 // pred_check_branch
      %1118 = sbr.rel (0) target = $region29
    $region28: #{tpu_custom_call.1} parent=1 // pred_region
      %1119 = dma.done [#allocation4], 1536
    $region29: #{tpu_custom_call.1} parent=1 // pred_fallthru
      _
    %1120 = vsyncpa [#allocation3], 1
    %1121 = vsyncpa [#allocation6], 1
    %1122 = vsyncpa [#allocation4], 1

</llo_original>
